<compile_context>
chip_gen: v5e
topology: v5e:2x2
jax: 0.10.0
libtpu: 0.0.40
codegen_flags: <defaults>
</compile_context>

<pallas_src>
import functools

import jax
import jax.numpy as jnp
from jax import lax
from jax.experimental import pallas as pl
from jax.experimental.pallas import tpu as pltpu

_LANES = 128
_EPS = 1e-12
_VMEM_LIMIT = 32 * 1024 * 1024       # scoped-VMEM request: safe on v5e/v6e/v7x
_VMEM_BUDGET = 24 * 1024 * 1024      # sizing target (headroom under the limit)
_LIVE_F32_TEMPS = 7                  # est. live full-block f32 temporaries
_MAX_BLOCK_ROWS = 8192


def _round_up(x, m):
    return (x + m - 1) // m * m


def _ipow(x, p):
    """x ** p for non-negative integer p, square-and-multiply (VPU only)."""
    if p == 0:
        return jnp.ones_like(x)
    result, base = None, x
    while p:
        if p & 1:
            result = base if result is None else result * base
        p >>= 1
        if p:
            base = base * base
    return result


def _pow(x, p):
    if float(p).is_integer() and 0 <= int(p) <= 64:
        return _ipow(x, int(p))
    # TODO(synk): non-integer alpha/gamma falls back to jnp.power (exp+log on
    # the single EUP slot); mmdet defaults (2.0 / 4.0) stay on the fast path.
    return jnp.power(x, p)


def _gfl_elementwise(pred, tgt, alpha, gamma, pos_c, neg_c):
    """pos_c * pos_loss + neg_c * neg_loss in f32.

    The leading minus signs are folded into the trace-time constants
    pos_c / neg_c (which may already include loss_weight for the 'none' path).
    """
    pred = pred.astype(jnp.float32)
    tgt = tgt.astype(jnp.float32)
    one_m_pred = 1.0 - pred
    # positive term (unsigned): log(pred+eps) * (1-pred)^alpha at peaks only
    t_pos = jnp.where(tgt == 1.0,
                      jnp.log(pred + _EPS) * _pow(one_m_pred, alpha), 0.0)
    # negative term (unsigned): log(1-pred+eps) * pred^alpha * (1-tgt)^gamma
    t_neg = (jnp.log(one_m_pred + _EPS) * _pow(pred, alpha)
             * _pow(1.0 - tgt, gamma))
    if pos_c == neg_c:
        s = t_pos + t_neg
        return -s if pos_c == 1.0 else s * (-pos_c)
    a = -t_pos if pos_c == 1.0 else t_pos * (-pos_c)
    b = -t_neg if neg_c == 1.0 else t_neg * (-neg_c)
    return a + b


def _gfl_none_kernel(*refs, alpha, gamma, pos_c, neg_c, has_weight):
    if has_weight:
        pred_ref, tgt_ref, w_ref, out_ref = refs
    else:
        pred_ref, tgt_ref, out_ref = refs
        w_ref = None
    loss = _gfl_elementwise(pred_ref[...], tgt_ref[...], alpha, gamma,
                            pos_c, neg_c)
    if has_weight:
        loss = loss * w_ref[...].astype(jnp.float32)
    out_ref[...] = loss.astype(out_ref.dtype)


def _block_partial(x):
    # (block_rows, 128) -> (8, 128): elementwise adds of (8,128) vreg tiles
    # (pure VPU), stored as one unmasked lane-dense tile per grid step.
    return jnp.sum(x.reshape(-1, 8, _LANES), axis=0)


def _gfl_partial_sum_kernel(*refs, alpha, gamma, pos_c, neg_c, has_weight,
                            valid_rows_last, need_mask):
    if has_weight:
        pred_ref, tgt_ref, w_ref, out_ref = refs
    else:
        pred_ref, tgt_ref, out_ref = refs
        w_ref = None
    loss = _gfl_elementwise(pred_ref[...], tgt_ref[...], alpha, gamma,
                            pos_c, neg_c)
    if has_weight:
        loss = loss * w_ref[...].astype(jnp.float32)

    if need_mask:
        i = pl.program_id(0)
        last = pl.num_programs(0) - 1

        @pl.when(i != last)
        def _():
            out_ref[...] = _block_partial(loss)

        @pl.when(i == last)
        def _():
            # Only the final (partial) block pays for the row-validity mask.
            # jnp.where (select) so NaN/Inf from unspecified tail rows are
            # dropped, not propagated.
            row_ids = lax.broadcasted_iota(jnp.int32, loss.shape, 0)
            out_ref[...] = _block_partial(
                jnp.where(row_ids < valid_rows_last, loss, 0.0))
    else:
        out_ref[...] = _block_partial(loss)


def _pick_block_rows(rows, stream_itemsizes):
    """Byte/dtype-aware block sizing against a VMEM budget (multiple of 8)."""
    per_row = (2 * _LANES * sum(stream_itemsizes)        # double-buffered tiles
               + _LIVE_F32_TEMPS * _LANES * 4)           # in-body f32 temps
    br = _VMEM_BUDGET // per_row
    br = max(8, min(_MAX_BLOCK_ROWS, (br // 8) * 8))
    br = min(br, _round_up(rows, 8))
    if br >= rows and rows >= 16:
        # Keep >= 2 grid steps so the "parallel" axis can split across the
        # two TensorCores on v7x; harmless on v5e/v6e.
        br = _round_up(pl.cdiv(rows, 2), 8)
    return br


class GaussianFocalLoss:
    """JAX/Pallas port of mmdet GaussianFocalLoss (dense heatmap path)."""

    def __init__(self, alpha=2.0, gamma=4.0, reduction='mean',
                 loss_weight=1.0, pos_weight=1.0, neg_weight=1.0):
        self.alpha = float(alpha)
        self.gamma = float(gamma)
        self.reduction = reduction
        self.loss_weight = float(loss_weight)
        self.pos_weight = float(pos_weight)
        self.neg_weight = float(neg_weight)

    def __call__(self, pred, target, weight=None, avg_factor=None,
                 reduction_override=None):
        assert reduction_override in (None, 'none', 'mean', 'sum')
        reduction = reduction_override if reduction_override else self.reduction
        # TODO(synk): gaussian_focal_loss_with_pos_inds (pos_inds/pos_labels
        # gather path) not implemented in-kernel; default heatmap path only.

        orig_shape = pred.shape
        numel = int(pred.size)
        n_aligned = (numel // _LANES) * _LANES
        rows = n_aligned // _LANES
        has_weight = weight is not None
        out_dtype = (pred.dtype if jnp.issubdtype(pred.dtype, jnp.floating)
                     else jnp.float32)

        if reduction == 'none':
            # Fold loss_weight into the per-term constants: saves a full-block
            # multiply inside the kernel.
            pos_c = self.pos_weight * self.loss_weight
            neg_c = self.neg_weight * self.loss_weight
        else:
            pos_c, neg_c = self.pos_weight, self.neg_weight

        pred_flat = jnp.ravel(pred)
        tgt_flat = jnp.ravel(target)
        w_flat = jnp.ravel(weight) if has_weight else None

        # <128-element tail handled in plain JAX (no full-array pad copy).
        rem_loss = None
        if n_aligned < numel:
            rem_loss = _gfl_elementwise(pred_flat[n_aligned:],
                                        tgt_flat[n_aligned:],
                                        self.alpha, self.gamma, pos_c, neg_c)
            if has_weight:
                rem_loss = rem_loss * w_flat[n_aligned:].astype(jnp.float32)

        main_out = None      # 'none': (rows, 128) array; 'mean'/'sum': scalar
        if rows > 0:
            def slab(flat):
                a = flat if flat.size == n_aligned else flat[:n_aligned]
                return a.reshape(rows, _LANES)

            operands = [slab(pred_flat), slab(tgt_flat)]
            if has_weight:
                operands.append(slab(w_flat))

            stream_itemsizes = [jnp.dtype(o.dtype).itemsize for o in operands]
            if reduction == 'none':
                stream_itemsizes.append(jnp.dtype(out_dtype).itemsize)
            block_rows = _pick_block_rows(rows, stream_itemsizes)
            grid_n = pl.cdiv(rows, block_rows)

            in_specs = [pl.BlockSpec((block_rows, _LANES), lambda i: (i, 0))
                        for _ in operands]
            cparams = pltpu.CompilerParams(
                dimension_semantics=("parallel",),
                vmem_limit_bytes=_VMEM_LIMIT)
            base_kwargs = dict(alpha=self.alpha, gamma=self.gamma,
                               pos_c=pos_c, neg_c=neg_c,
                               has_weight=has_weight)

            if reduction == 'none':
                main_out = pl.pallas_call(
                    functools.partial(_gfl_none_kernel, **base_kwargs),
                    out_shape=jax.ShapeDtypeStruct((rows, _LANES), out_dtype),
                    grid_spec=pltpu.PrefetchScalarGridSpec(
                        num_scalar_prefetch=0, grid=(grid_n,),
                        in_specs=in_specs,
                        out_specs=pl.BlockSpec((block_rows, _LANES),
                                               lambda i: (i, 0))),
                    compiler_params=cparams,
                )(*operands)
            else:
                need_mask = grid_n * block_rows != rows
                valid_rows_last = rows - (grid_n - 1) * block_rows
                partials = pl.pallas_call(
                    functools.partial(_gfl_partial_sum_kernel,
                                      need_mask=need_mask,
                                      valid_rows_last=valid_rows_last,
                                      **base_kwargs),
                    out_shape=jax.ShapeDtypeStruct((grid_n * 8, _LANES),
                                                   jnp.float32),
                    grid_spec=pltpu.PrefetchScalarGridSpec(
                        num_scalar_prefetch=0, grid=(grid_n,),
                        in_specs=in_specs,
                        out_specs=pl.BlockSpec((8, _LANES),
                                               lambda i: (i, 0))),
                    compiler_params=cparams,
                )(*operands)
                main_out = jnp.sum(partials)

        if reduction == 'none':
            parts = []
            if main_out is not None:
                parts.append(main_out.reshape(-1))
            if rem_loss is not None:
                parts.append(rem_loss.astype(out_dtype))
            if not parts:
                return jnp.zeros(orig_shape, out_dtype)
            out_flat = parts[0] if len(parts) == 1 else jnp.concatenate(parts)
            # mmdet: reduction='none' + avg_factor returns the unreduced loss.
            return out_flat.reshape(orig_shape)

        total = main_out if main_out is not None else jnp.zeros((), jnp.float32)
        if rem_loss is not None:
            total = total + jnp.sum(rem_loss)

        if reduction == 'sum':
            if avg_factor is not None:
                raise ValueError(
                    'avg_factor can not be used with reduction="sum"')
            loss = total
        else:  # 'mean'
            if avg_factor is None:
                loss = total / float(numel)
            else:
                loss = total / (avg_factor + jnp.finfo(jnp.float32).eps)
        return self.loss_weight * loss


# ------------------------- pure-JAX reference -------------------------------
def _ref_loss(pred, target, alpha, gamma, pos_weight, neg_weight, weight=None):
    eps = 1e-12
    pred = pred.astype(jnp.float32)
    target = target.astype(jnp.float32)
    pos_w = (target == 1.0).astype(jnp.float32)
    neg_w = (1.0 - target) ** gamma
    pos_loss = -jnp.log(pred + eps) * (1.0 - pred) ** alpha * pos_w
    neg_loss = -jnp.log(1.0 - pred + eps) * pred ** alpha * neg_w
    loss = pos_weight * pos_loss + neg_weight * neg_loss
    if weight is not None:
        loss = loss * weight.astype(jnp.float32)
    return loss


def _make_inputs(key, shape):
    k1, k2, k3, k4 = jax.random.split(key, 4)
    pred = jax.nn.sigmoid(jax.random.normal(k1, shape, jnp.float32))
    target = jax.random.uniform(k2, shape, jnp.float32)
    peak_mask = jax.random.uniform(k3, shape) > 0.97
    target = jnp.where(peak_mask, 1.0, target)
    weight = jax.random.uniform(k4, shape, jnp.float32)
    return pred, target, weight


if __name__ == "__main__":
    key = jax.random.PRNGKey(0)
    loss_mod = GaussianFocalLoss(alpha=2.0, gamma=4.0, reduction='mean',
                                 loss_weight=1.0, pos_weight=1.0,
                                 neg_weight=1.0)
    k1, k2, k3, k4, k5 = jax.random.split(key, 5)

    # 1) Small NCHW heatmap, mean reduction, no weight (module default path).
    pred, target, weight = _make_inputs(k1, (2, 4, 16, 16))
    out = jax.block_until_ready(loss_mod(pred, target))
    ref = _ref_loss(pred, target, 2.0, 4.0, 1.0, 1.0).mean()
    assert jnp.allclose(out, ref, rtol=1e-4, atol=1e-6), (out, ref)

    # 2) reduction='none' with per-element weight.
    out_none = jax.block_until_ready(
        loss_mod(pred, target, weight=weight, reduction_override='none'))
    ref_none = _ref_loss(pred, target, 2.0, 4.0, 1.0, 1.0, weight)
    assert out_none.shape == pred.shape
    assert jnp.allclose(out_none, ref_none, rtol=1e-4, atol=1e-6)

    # 3) Multi-block grid, sum reduction with weight.
    pred3, target3, weight3 = _make_inputs(k2, (4, 8, 96, 128))
    out_sum = jax.block_until_ready(
        loss_mod(pred3, target3, weight=weight3, reduction_override='sum'))
    ref_sum = _ref_loss(pred3, target3, 2.0, 4.0, 1.0, 1.0, weight3).sum()
    assert jnp.allclose(out_sum, ref_sum, rtol=1e-4, atol=1e-4), (out_sum,
                                                                  ref_sum)

    # 4) Odd numel (numel % 128 != 0 -> plain-JAX tail), mean with avg_factor.
    pred4, target4, _ = _make_inputs(k3, (3, 5, 37))
    out4 = jax.block_until_ready(loss_mod(pred4, target4, avg_factor=7.0))
    ref4 = _ref_loss(pred4, target4, 2.0, 4.0, 1.0, 1.0).sum() / (
        7.0 + jnp.finfo(jnp.float32).eps)
    assert jnp.allclose(out4, ref4, rtol=1e-4, atol=1e-6), (out4, ref4)

    # 5) Multi-block grid with a partial (pl.when-masked) last block, mean.
    pred5, target5, weight5 = _make_inputs(k4, (4097, 128))
    out5 = jax.block_until_ready(loss_mod(pred5, target5, weight=weight5))
    ref5 = _ref_loss(pred5, target5, 2.0, 4.0, 1.0, 1.0, weight5).mean()
    assert jnp.allclose(out5, ref5, rtol=1e-4, atol=1e-6), (out5, ref5)

    # 6) bf16 inputs (dtype-aware block sizing) + non-trivial loss/pos/neg
    #    weights (trace-time constant folding), sum reduction.
    loss_mod2 = GaussianFocalLoss(alpha=2.0, gamma=4.0, reduction='sum',
                                  loss_weight=0.5, pos_weight=2.0,
                                  neg_weight=1.5)
    pred6, target6, _ = _make_inputs(k5, (2, 4, 32, 128))
    pred6 = pred6.astype(jnp.bfloat16)
    target6 = target6.astype(jnp.bfloat16)
    out6 = jax.block_until_ready(loss_mod2(pred6, target6))
    ref6 = 0.5 * _ref_loss(pred6, target6, 2.0, 4.0, 2.0, 1.5).sum()
    assert jnp.allclose(out6, ref6, rtol=2e-3, atol=1e-3), (out6, ref6)

    # 7) 'none' with folded loss_weight and pos_c != neg_c.
    out7 = jax.block_until_ready(
        loss_mod2(pred, target, reduction_override='none'))
    ref7 = 0.5 * _ref_loss(pred, target, 2.0, 4.0, 2.0, 1.5)
    assert jnp.allclose(out7, ref7, rtol=1e-4, atol=1e-6)

    print("KERNEL_OK")
</pallas_src>

<mosaic_0001>
module attributes {stable_mosaic.version = 11 : i64} {
  func.func @_gfl_partial_sum_kernel(%arg0: i32, %arg1: memref<8x128xf32, #tpu.memory_space<vmem>>, %arg2: memref<8x128xf32, #tpu.memory_space<vmem>>, %arg3: memref<8x128xf32, #tpu.memory_space<vmem>>) attributes {dimension_semantics = [#tpu.dimension_semantics<parallel>], iteration_bounds = array<i64: 2>, scalar_prefetch = 0 : i64, scratch_operands = 0 : i64, tpu.core_type = #tpu.core_type<tc>, window_params = [{transform_indices = @transform_0, window_bounds = array<i64: 8, 128>}, {transform_indices = @transform_1, window_bounds = array<i64: 8, 128>}, {transform_indices = @transform_2, window_bounds = array<i64: 8, 128>}]} {
    %c0 = arith.constant 0 : index
    %c0_0 = arith.constant 0 : index
    %0 = vector.load %arg1[%c0, %c0_0] : memref<8x128xf32, #tpu.memory_space<vmem>>, vector<8x128xf32>
    %c0_1 = arith.constant 0 : index
    %c0_2 = arith.constant 0 : index
    %1 = vector.load %arg2[%c0_1, %c0_2] : memref<8x128xf32, #tpu.memory_space<vmem>>, vector<8x128xf32>
    %cst = arith.constant 1.000000e+00 : f32
    %2 = vector.broadcast %cst : f32 to vector<8x128xf32>
    %3 = arith.subf %2, %0 : vector<8x128xf32>
    %cst_3 = arith.constant 1.000000e+00 : f32
    %4 = vector.broadcast %cst_3 : f32 to vector<8x128xf32>
    %5 = arith.cmpf oeq, %1, %4 : vector<8x128xf32>
    %cst_4 = arith.constant 9.99999996E-13 : f32
    %6 = vector.broadcast %cst_4 : f32 to vector<8x128xf32>
    %7 = arith.addf %0, %6 : vector<8x128xf32>
    %8 = math.log %7 : vector<8x128xf32>
    %9 = arith.mulf %3, %3 : vector<8x128xf32>
    %10 = arith.mulf %8, %9 : vector<8x128xf32>
    %cst_5 = arith.constant 0.000000e+00 : f32
    %11 = vector.broadcast %cst_5 : f32 to vector<8x128xf32>
    %12 = arith.select %5, %10, %11 : vector<8x128xi1>, vector<8x128xf32>
    %cst_6 = arith.constant 9.99999996E-13 : f32
    %13 = vector.broadcast %cst_6 : f32 to vector<8x128xf32>
    %14 = arith.addf %3, %13 : vector<8x128xf32>
    %15 = math.log %14 : vector<8x128xf32>
    %16 = arith.mulf %0, %0 : vector<8x128xf32>
    %17 = arith.mulf %15, %16 : vector<8x128xf32>
    %cst_7 = arith.constant 1.000000e+00 : f32
    %18 = vector.broadcast %cst_7 : f32 to vector<8x128xf32>
    %19 = arith.subf %18, %1 : vector<8x128xf32>
    %20 = arith.mulf %19, %19 : vector<8x128xf32>
    %21 = arith.mulf %20, %20 : vector<8x128xf32>
    %22 = arith.mulf %17, %21 : vector<8x128xf32>
    %23 = arith.addf %12, %22 : vector<8x128xf32>
    %cst_8 = arith.constant 0.000000e+00 : f32
    %24 = vector.broadcast %cst_8 : f32 to vector<8x128xf32>
    %25 = arith.subf %24, %23 : vector<8x128xf32>
    %26 = vector.shape_cast %25 : vector<8x128xf32> to vector<1x8x128xf32>
    %cst_9 = arith.constant dense<0.000000e+00> : vector<8x128xf32>
    %27 = vector.multi_reduction <add>, %26, %cst_9 [0] : vector<1x8x128xf32> to vector<8x128xf32>
    %c0_10 = arith.constant 0 : index
    %c0_11 = arith.constant 0 : index
    %28 = vector.load %arg3[%c0_10, %c0_11] : memref<8x128xf32, #tpu.memory_space<vmem>>, vector<8x128xf32>
    tpu.vector_store %arg3[%c0_10, %c0_11], %27 {strides = array<i32>} : memref<8x128xf32, #tpu.memory_space<vmem>>, vector<8x128xf32>,
    return
  }
  func.func @transform_0(%arg0: i32) -> (i32, i32) {
    %c0_i32 = arith.constant 0 : i32
    %c0_i32_0 = arith.constant 0 : i32
    return %arg0, %c0_i32 : i32, i32
  }
  func.func @transform_1(%arg0: i32) -> (i32, i32) {
    %c0_i32 = arith.constant 0 : i32
    %c0_i32_0 = arith.constant 0 : i32
    return %arg0, %c0_i32 : i32, i32
  }
  func.func @transform_2(%arg0: i32) -> (i32, i32) {
    %c0_i32 = arith.constant 0 : i32
    %c0_i32_0 = arith.constant 0 : i32
    return %arg0, %c0_i32 : i32, i32
  }
}

</mosaic_0001>

<llo_original>
// kernel: tpu_custom_call.1
$region0: #{tpu_custom_call.1}
  #allocation0 [shape = 'u32[]', space=smem, size = 0x4, offset = 0x4, fixed_abs, tag = 'smem constant byte address 0x4 - core index']
  #allocation1 [shape = 'u32[72,128]{1,0:T(1,128)}', space=vmem, size = 0x9000, scoped, tag = 'internal scratch']
  %s0 = inlined_call_operand.hbm [shape: f32[16,128], index: 0, kind: input, shape index: {}]
  %s1 = inlined_call_operand.hbm [shape: f32[16,128], index: 1, kind: input, shape index: {}]
  %s2 = inlined_call_operand.hbm [shape: f32[16,128], index: 2, kind: output, shape index: {}]
  %s3 = sld [smem:[#allocation0]]
  $region49: #{tpu_custom_call.1} parent=0
    _
  %s5 = ssub.s32 1, %s3
  %s6 = scalar_select 0, %s5, %s3
  $region1: #{tpu_custom_call.1} parent=0
    #allocation2 [shape = 'u8[8192]{0}', space=vmem, size = 0x2000, scoped, tag = 'input window, operand 0']
    #allocation3 [shape = 's32[2]{0}', space=sflag, size = 0x8, scoped, tag = 'scoped memory for tpu_custom_call.1']
    #allocation4 [shape = 's32[2]{0}', space=sflag, size = 0x8, scoped, tag = 'scoped memory for tpu_custom_call.1']
    #allocation5 [shape = 'u8[8192]{0}', space=vmem, size = 0x2000, scoped, tag = 'input window, operand 1']
    #allocation6 [shape = 's32[2]{0}', space=sflag, size = 0x8, scoped, tag = 'scoped memory for tpu_custom_call.1']
    #allocation7 [shape = 'u8[8192]{0}', space=vmem, size = 0x2000, scoped, tag = 'output window, operand 0']
    %7 = vsyncpa [#allocation3], 0
    %s8 = scalar_lea.sflag [#allocation3], 1
    %9 = vsyncpa %s8, 0
    %10 = vsyncpa [#allocation6], 0
    %s11 = scalar_lea.sflag [#allocation6], 1
    %12 = vsyncpa %s11, 0
    %13 = vsyncpa [#allocation4], 0
    %s14 = scalar_lea.sflag [#allocation4], 1
    %15 = vsyncpa %s14, 0
    loop: start=0, step=1, limit=4
    $region2: #{tpu_custom_call.1} parent=1 // loop_pre_header
      _
    $region3: #{tpu_custom_call.1} parent=1 // loop_header
      %s17 = sphi 0, %s21
      %p18 = scmp.ge.s32.totalorder %s17, 4
      %s27 = sphi 0, %s29
      %s30 = sphi 0, %s27
      %s31 = sphi 0, %s30
      %s47 = sphi 0, %s31
      %s53 = sphi 0, %s55
      %s56 = sphi 0, %s53
      %s57 = sphi 0, %s56
      %s73 = sphi 0, %s57
      %s79 = sphi 0, %s81
      %s82 = sphi 0, %s79
      %s83 = sphi 0, %s82
      %s99 = sphi 0, %s83
    $region4: #{tpu_custom_call.1} parent=1 // loop_header_branch
      %20 = sbr.rel (%p18) target = $region8
    $region5: #{tpu_custom_call.1} parent=1 // loop_body
      %s22 = ssub.s32 %s17, 1
      %s23 = ssub.s32 %s17, 2
      %s24 = sadd.s32 %s17, 1
      %s25 = ssub.s32 %s17, %s24
      %p26 = scmp.eq.s32.totalorder %s25, 0
      %s28 = sadd.s32 %s27, 1
      %s29 = scalar_select %p26, %s27, %s28
      %p32 = pneg %p26
      %p33 = scmp.eq.s32.totalorder %s17, 1
      %p34 = por %p32, %p33
      %p35 = scmp.ne.s32.totalorder %s27, %s30
      %p36 = scmp.eq.s32.totalorder %s17, 0
      %p37 = por %p35, %p36
      %p38 = scmp.ne.s32.totalorder %s27, %s30
      %p39 = scmp.eq.s32.totalorder %s22, 1
      %p40 = por %p38, %p39
      %p41 = scmp.ne.s32.totalorder %s30, %s31
      %p42 = scmp.eq.s32.totalorder %s22, 0
      %p43 = por %p41, %p42
      %p44 = scmp.ne.s32.totalorder %s30, %s31
      %p45 = scmp.eq.s32.totalorder %s23, 1
      %p46 = por %p44, %p45
      %p48 = scmp.ne.s32.totalorder %s31, %s47
      %p49 = scmp.eq.s32.totalorder %s23, 0
      %p50 = por %p48, %p49
      %s51 = ssub.s32 %s17, %s24
      %p52 = scmp.eq.s32.totalorder %s51, 0
      %s54 = sadd.s32 %s53, 1
      %s55 = scalar_select %p52, %s53, %s54
      %p58 = pneg %p52
      %p59 = scmp.eq.s32.totalorder %s17, 1
      %p60 = por %p58, %p59
      %p61 = scmp.ne.s32.totalorder %s53, %s56
      %p62 = scmp.eq.s32.totalorder %s17, 0
      %p63 = por %p61, %p62
      %p64 = scmp.ne.s32.totalorder %s53, %s56
      %p65 = scmp.eq.s32.totalorder %s22, 1
      %p66 = por %p64, %p65
      %p67 = scmp.ne.s32.totalorder %s56, %s57
      %p68 = scmp.eq.s32.totalorder %s22, 0
      %p69 = por %p67, %p68
      %p70 = scmp.ne.s32.totalorder %s56, %s57
      %p71 = scmp.eq.s32.totalorder %s23, 1
      %p72 = por %p70, %p71
      %p74 = scmp.ne.s32.totalorder %s57, %s73
      %p75 = scmp.eq.s32.totalorder %s23, 0
      %p76 = por %p74, %p75
      %s77 = ssub.s32 %s17, %s24
      %p78 = scmp.eq.s32.totalorder %s77, 0
      %s80 = sadd.s32 %s79, 1
      %s81 = scalar_select %p78, %s79, %s80
      %p84 = pneg %p78
      %p85 = scmp.eq.s32.totalorder %s17, 1
      %p86 = por %p84, %p85
      %p87 = scmp.ne.s32.totalorder %s79, %s82
      %p88 = scmp.eq.s32.totalorder %s17, 0
      %p89 = por %p87, %p88
      %p90 = scmp.ne.s32.totalorder %s79, %s82
      %p91 = scmp.eq.s32.totalorder %s22, 1
      %p92 = por %p90, %p91
      %p93 = scmp.ne.s32.totalorder %s82, %s83
      %p94 = scmp.eq.s32.totalorder %s22, 0
      %p95 = por %p93, %p94
      %p96 = scmp.ne.s32.totalorder %s82, %s83
      %p97 = scmp.eq.s32.totalorder %s23, 1
      %p98 = por %p96, %p97
      %p100 = scmp.ne.s32.totalorder %s83, %s99
      %p101 = scmp.eq.s32.totalorder %s23, 0
      %p102 = por %p100, %p101
      %p103 = scmp.le.s32.totalorder 1, %s17
      %p104 = scmp.lt.s32.totalorder %s17, 3
      %p105 = pnand %p103, %p104
      %p106 = pneg %p105
      // Predicated region
      $region9: #{tpu_custom_call.1} parent=5 // pred_check
        _
      $region10: #{tpu_custom_call.1} parent=5 // pred_check_branch
        %108 = sbr.rel (%p105) target = $region12
      $region11: #{tpu_custom_call.1} parent=5 // pred_region
        %s109 = ssub.s32 %s17, 1
      $region12: #{tpu_custom_call.1} parent=5 // pred_fallthru
        _
      %p110 = scmp.lt.s32.totalorder %s17, 2
      // Predicated region
      $region13: #{tpu_custom_call.1} parent=5 // pred_check
        %p111 = pneg %p110
      $region14: #{tpu_custom_call.1} parent=5 // pred_check_branch
        %113 = sbr.rel (%p111) target = $region16
      $region15: #{tpu_custom_call.1} parent=5 // pred_region
        // Predicated region
        $region17: #{tpu_custom_call.1} parent=15 // pred_check
          %p114 = pneg %p37
        $region18: #{tpu_custom_call.1} parent=15 // pred_check_branch
          %116 = sbr.rel (%p114) target = $region20
        $region19: #{tpu_custom_call.1} parent=15 // pred_region
          %s117 = sand.u32 %s27, 1
          %s118 = scalar_lea.sflag [#allocation3], %s117
          %s119 = sand.u32 %s27, 1
          %s120 = smul.addr %s119, 8
          %s121 = scalar_lea.vmem [#allocation2], %s120
          %123 = vsyncadd %s118, 0
          %s124 = smul.addr %s17, 8
          %s125 = scalar_lea.hbm %s0, %s124
          %s127 = sshll.u32 %s125, 4
          %s128 = int_to_ptr.hbm [resolvable:$true] %s127
          %s129 = sshll.u32 %s121, 4
          %s130 = int_to_ptr.vmem [resolvable:$true] %s129
          %132 = dma.hbm_to_vmem [thread:$0]  %s128, 128, %s130, %s118
        $region20: #{tpu_custom_call.1} parent=15 // pred_fallthru
          _
        // Predicated region
        $region21: #{tpu_custom_call.1} parent=15 // pred_check
          %p133 = pneg %p63
        $region22: #{tpu_custom_call.1} parent=15 // pred_check_branch
          %135 = sbr.rel (%p133) target = $region24
        $region23: #{tpu_custom_call.1} parent=15 // pred_region
          %s136 = sand.u32 %s53, 1
          %s137 = scalar_lea.sflag [#allocation6], %s136
          %s138 = sand.u32 %s53, 1
          %s139 = smul.addr %s138, 8
          %s140 = scalar_lea.vmem [#allocation5], %s139
          %142 = vsyncadd %s137, 0
          %s143 = smul.addr %s17, 8
          %s144 = scalar_lea.hbm %s1, %s143
          %s146 = sshll.u32 %s144, 4
          %s147 = int_to_ptr.hbm [resolvable:$true] %s146
          %s148 = sshll.u32 %s140, 4
          %s149 = int_to_ptr.vmem [resolvable:$true] %s148
          %151 = dma.hbm_to_vmem [thread:$0]  %s147, 128, %s149, %s137
        $region24: #{tpu_custom_call.1} parent=15 // pred_fallthru
          _
      $region16: #{tpu_custom_call.1} parent=5 // pred_fallthru
        _
      %p152 = scmp.le.s32.totalorder 1, %s17
      %p153 = scmp.lt.s32.totalorder %s17, 3
      %p154 = pnand %p152, %p153
      %p155 = pneg %p154
      // Predicated region
      $region25: #{tpu_custom_call.1} parent=5 // pred_check
        _
      $region26: #{tpu_custom_call.1} parent=5 // pred_check_branch
        %157 = sbr.rel (%p154) target = $region28
      $region27: #{tpu_custom_call.1} parent=5 // pred_region
        %s158 = ssub.s32 %s17, 1
        %s159 = sand.u32 %s30, 1
        %s160 = scalar_lea.sflag [#allocation3], %s159
        %s161 = sand.u32 %s30, 1
        %s162 = smul.addr %s161, 8
        %s163 = scalar_lea.vmem [#allocation2], %s162
        // Predicated region
        $region29: #{tpu_custom_call.1} parent=27 // pred_check
          %p164 = pneg %p43
        $region30: #{tpu_custom_call.1} parent=27 // pred_check_branch
          %166 = sbr.rel (%p164) target = $region32
        $region31: #{tpu_custom_call.1} parent=27 // pred_region
          %168 = dma.done %s160, 128
        $region32: #{tpu_custom_call.1} parent=27 // pred_fallthru
          _
        %s169 = sand.u32 %s56, 1
        %s170 = scalar_lea.sflag [#allocation6], %s169
        %s171 = sand.u32 %s56, 1
        %s172 = smul.addr %s171, 8
        %s173 = scalar_lea.vmem [#allocation5], %s172
        // Predicated region
        $region33: #{tpu_custom_call.1} parent=27 // pred_check
          %p174 = pneg %p69
        $region34: #{tpu_custom_call.1} parent=27 // pred_check_branch
          %176 = sbr.rel (%p174) target = $region36
        $region35: #{tpu_custom_call.1} parent=27 // pred_region
          %178 = dma.done %s170, 128
        $region36: #{tpu_custom_call.1} parent=27 // pred_fallthru
          _
        %s179 = sand.u32 %s30, 1
        %s180 = scalar_lea.sflag [#allocation3], %s179
        %s181 = sand.u32 %s30, 1
        %s182 = smul.addr %s181, 8
        %s183 = scalar_lea.vmem [#allocation2], %s182
        %p184 = pneg %p43
        %p185 = pneg %p40
        %s186 = sand.u32 %s56, 1
        %s187 = scalar_lea.sflag [#allocation6], %s186
        %s188 = sand.u32 %s56, 1
        %s189 = smul.addr %s188, 8
        %s190 = scalar_lea.vmem [#allocation5], %s189
        %p191 = pneg %p69
        %p192 = pneg %p66
        %p193 = pneg %p95
        %p194 = pneg %p92
        %s195 = sand.u32 %s82, 1
        %s196 = scalar_lea.sflag [#allocation4], %s195
        %s197 = sand.u32 %s82, 1
        %s198 = smul.addr %s197, 8
        %s199 = scalar_lea.vmem [#allocation7], %s198
        %v200 = vld [vmem:[%s163] sm:$0xff]
        %v201 = vld [vmem:[%s173] sm:$0xff]
        %v202 = vsub.f32 1.0, %v200
        %vm203 = vcmp.eq.f32.partialorder %v201, 1.0
        %v204 = vadd.f32 %v200, 1e-12
        %v205 = vlog2.pop %v204
        %v206 = vmul.f32 %v205, 0.6931472
        %v207 = vmul.f32 %v202, %v202
        %v208 = vmul.f32 %v206, %v207
        %v209 = vsel %vm203, %v208, 0.0
        %v210 = vadd.f32 %v202, 1e-12
        %v211 = vlog2.pop %v210
        %v212 = vmul.f32 %v211, 0.6931472
        %v213 = vmul.f32 %v200, %v200
        %v214 = vmul.f32 %v212, %v213
        %v215 = vsub.f32 1.0, %v201
        %v216 = vmul.f32 %v215, %v215
        %v217 = vmul.f32 %v216, %v216
        %v218 = vmul.f32 %v214, %v217
        %v219 = vadd.f32 %v209, %v218
        %v220 = vsub.f32 0.0, %v219
        %v221 = vadd.f32 %v220, 0.0
        %222 = vst [vmem:[%s199] sm:$0xff] %v221
        %s223 = sand.u32 %s82, 1
        %s224 = scalar_lea.sflag [#allocation4], %s223
        %s225 = sand.u32 %s82, 1
        %s226 = smul.addr %s225, 8
        %s227 = scalar_lea.vmem [#allocation7], %s226
        // Predicated region
        $region37: #{tpu_custom_call.1} parent=27 // pred_check
          %p228 = pneg %p92
        $region38: #{tpu_custom_call.1} parent=27 // pred_check_branch
          %230 = sbr.rel (%p228) target = $region40
        $region39: #{tpu_custom_call.1} parent=27 // pred_region
          %232 = vsyncadd %s224, 0
          %s233 = smul.addr %s22, 8
          %s234 = scalar_lea.hbm %s2, %s233
          %s236 = sshll.u32 %s227, 4
          %s237 = int_to_ptr.vmem [resolvable:$true] %s236
          %s238 = sshll.u32 %s234, 4
          %s239 = int_to_ptr.hbm [resolvable:$true] %s238
          %241 = dma.vmem_to_hbm [thread:$0]  %s237, 128, %s239, %s224
        $region40: #{tpu_custom_call.1} parent=27 // pred_fallthru
          _
      $region28: #{tpu_custom_call.1} parent=5 // pred_fallthru
        _
      %p242 = scmp.le.s32.totalorder 2, %s17
      // Predicated region
      $region41: #{tpu_custom_call.1} parent=5 // pred_check
        %p243 = pneg %p242
      $region42: #{tpu_custom_call.1} parent=5 // pred_check_branch
        %245 = sbr.rel (%p243) target = $region44
      $region43: #{tpu_custom_call.1} parent=5 // pred_region
        %s246 = ssub.s32 %s17, 2
        // Predicated region
        $region45: #{tpu_custom_call.1} parent=43 // pred_check
          %p247 = pneg %p98
        $region46: #{tpu_custom_call.1} parent=43 // pred_check_branch
          %249 = sbr.rel (%p247) target = $region48
        $region47: #{tpu_custom_call.1} parent=43 // pred_region
          %s250 = sand.u32 %s83, 1
          %s251 = scalar_lea.sflag [#allocation4], %s250
          %s252 = sand.u32 %s83, 1
          %s253 = smul.addr %s252, 8
          %s254 = scalar_lea.vmem [#allocation7], %s253
          %256 = dma.done %s251, 128
        $region48: #{tpu_custom_call.1} parent=43 // pred_fallthru
          _
      $region44: #{tpu_custom_call.1} parent=5 // pred_fallthru
        _
    $region6: #{tpu_custom_call.1} parent=1 // loop_footer
      %s21 = sadd.s32 1, %s17
    $region7: #{tpu_custom_call.1} parent=1 // loop_footer_branch
      %16 = sbr.rel target = $region3
    $region8: #{tpu_custom_call.1} parent=1 // loop_exit
      _
    %257 = vsyncpa [#allocation3], 1
    %s258 = scalar_lea.sflag [#allocation3], 1
    %259 = vsyncpa %s258, 1
    %260 = vsyncpa [#allocation6], 1
    %s261 = scalar_lea.sflag [#allocation6], 1
    %262 = vsyncpa %s261, 1
    %263 = vsyncpa [#allocation4], 1
    %s264 = scalar_lea.sflag [#allocation4], 1
    %265 = vsyncpa %s264, 1

</llo_original>
